<compile_context>
chip_gen: v7x
topology: tpu7x:2x2x1
jax: 0.10.0
libtpu: 0.0.40
codegen_flags: <defaults>
</compile_context>

<pallas_src>
import functools

import jax
import jax.numpy as jnp
from jax.experimental import pallas as pl
from jax.experimental.pallas import tpu as pltpu


def _round_up(x: int, m: int) -> int:
    return ((x + m - 1) // m) * m


# ---------------------------------------------------------------------------
# Fused Pallas kernel: all `depth` linear layers + ReLUs in one body.
#   x:  (tb, D)        f32
#   w:  (depth, D, D)  bf16  (zero-padded, (in, out) layout)
#   b:  (depth, 1, D)  f32   (zero-padded)
#   o:  (tb, D)        f32
# ---------------------------------------------------------------------------
def _mlp_fused_kernel(x_ref, w_ref, b_ref, o_ref, *, depth: int):
    act = x_ref[...]                                   # f32 (tb, D), stays in vregs/VMEM
    for layer in range(depth):                         # static unroll (depth is small)
        y = jnp.dot(act.astype(jnp.bfloat16), w_ref[layer],
                    preferred_element_type=jnp.float32)
        y = y + b_ref[layer]                           # (1, D) broadcast, f32 epilogue
        if layer < depth - 1:
            y = jnp.maximum(y, 0.0)                    # ReLU (no ReLU on output layer)
        act = y
    o_ref[...] = act.astype(o_ref.dtype)


# ---------------------------------------------------------------------------
# Parameter construction (matches nn.Linear default init: U(-1/sqrt(in), +1/sqrt(in)))
# ---------------------------------------------------------------------------
def init_linear_params(key, in_features, out_features, dtype=jnp.float32):
    kw, kb = jax.random.split(key)
    bound = 1.0 / jnp.sqrt(jnp.asarray(in_features, dtype))
    # Stored as (in, out); equivalent to PyTorch's (out, in) weight transposed.
    w = jax.random.uniform(kw, (in_features, out_features), dtype,
                           minval=-bound, maxval=bound)
    b = jax.random.uniform(kb, (out_features,), dtype,
                           minval=-bound, maxval=bound)
    return w, b


def make_mlp_params(key, n_inputs, n_outputs, hparams):
    width = hparams["mlp_width"]
    depth = hparams["mlp_depth"]
    keys = jax.random.split(key, depth)
    params = {"input": init_linear_params(keys[0], n_inputs, width)}
    params["hiddens"] = [
        init_linear_params(keys[1 + i], width, width) for i in range(depth - 2)
    ]
    params["output"] = init_linear_params(keys[depth - 1], width, n_outputs)
    return params


# ---------------------------------------------------------------------------
# One-time fused-parameter preparation: pad + stack weights/biases.
# Weights -> bf16 (MXU operands), biases -> f32 (epilogue).
# ---------------------------------------------------------------------------
def prepare_fused_params(params):
    layers = [params["input"], *params["hiddens"], params["output"]]
    depth = len(layers)
    n_in = layers[0][0].shape[0]
    n_out = layers[-1][0].shape[1]

    # Common lane-dense padded feature dim (multiple of 128).
    dims = [n_in] + [w.shape[1] for (w, _) in layers]
    D = _round_up(max(dims), 128)

    w_stack = jnp.zeros((depth, D, D), jnp.bfloat16)
    b_stack = jnp.zeros((depth, 1, D), jnp.float32)
    for i, (w, b) in enumerate(layers):
        k, n = w.shape
        w_stack = w_stack.at[i, :k, :n].set(w.astype(jnp.bfloat16))
        b_stack = b_stack.at[i, 0, :n].set(b.astype(jnp.float32))

    return {
        "w_stack": w_stack,       # (depth, D, D) bf16
        "b_stack": b_stack,       # (depth, 1, D) f32
        "depth": depth,
        "D": D,
        "n_in": n_in,
        "n_out": n_out,
    }


# ---------------------------------------------------------------------------
# Fused MLP forward: one pallas_call for the whole network.
# Pad / slice plumbing is jitted so XLA fuses it around the custom call.
# ---------------------------------------------------------------------------
@functools.partial(jax.jit,
                   static_argnames=("depth", "D", "n_in", "n_out", "block_batch"))
def _mlp_forward_impl(x, w_stack, b_stack, *, depth, D, n_in, n_out, block_batch):
    B = x.shape[0]
    tb = min(_round_up(B, 8), block_batch)     # sublane-aligned batch tile
    Bp = _round_up(B, tb)

    # Pad batch rows and input features with zeros (exact under zero-padded W/b).
    xp = jnp.zeros((Bp, D), jnp.float32)
    xp = xp.at[:B, :n_in].set(x.astype(jnp.float32))

    grid = (Bp // tb,)
    flops = 2 * Bp * D * D * depth
    bytes_accessed = (xp.size * 4 + w_stack.size * 2 + b_stack.size * 4 + Bp * D * 4)

    out_p = pl.pallas_call(
        functools.partial(_mlp_fused_kernel, depth=depth),
        out_shape=jax.ShapeDtypeStruct((Bp, D), jnp.float32),
        grid=grid,
        in_specs=[
            pl.BlockSpec((tb, D), lambda m: (m, 0)),           # x tile per program
            pl.BlockSpec((depth, D, D), lambda m: (0, 0, 0)),  # weights resident (constant idx)
            pl.BlockSpec((depth, 1, D), lambda m: (0, 0, 0)),  # biases resident
        ],
        out_specs=pl.BlockSpec((tb, D), lambda m: (m, 0)),     # lane-dense (D = k*128) store
        compiler_params=pltpu.CompilerParams(
            dimension_semantics=("parallel",),                 # shard batch tiles across TCs
            vmem_limit_bytes=32 * 1024 * 1024,
        ),
        cost_estimate=pl.CostEstimate(
            flops=flops, transcendentals=0, bytes_accessed=bytes_accessed),
    )(xp, w_stack, b_stack)

    return out_p[:B, :n_out]


def mlp_forward_fused(fused, x, *, block_batch=256):
    return _mlp_forward_impl(
        x, fused["w_stack"], fused["b_stack"],
        depth=fused["depth"], D=fused["D"],
        n_in=fused["n_in"], n_out=fused["n_out"],
        block_batch=block_batch)


# ---------------------------------------------------------------------------
# Pure-JAX f32 reference (mirrors the PyTorch module's forward, dropout = id).
# ---------------------------------------------------------------------------
def mlp_forward_ref(params, x):
    w, b = params["input"]
    x = jnp.maximum(x @ w + b, 0.0)
    for (w, b) in params["hiddens"]:
        x = jnp.maximum(x @ w + b, 0.0)
    w, b = params["output"]
    return x @ w + b


if __name__ == "__main__":
    hparams = {"mlp_width": 64, "mlp_depth": 3, "mlp_dropout": 0.0}
    n_inputs, n_outputs = 32, 16
    batch = 8

    key = jax.random.PRNGKey(0)
    k_params, k_x = jax.random.split(key)

    params = make_mlp_params(k_params, n_inputs, n_outputs, hparams)
    fused = prepare_fused_params(params)
    x = jax.random.normal(k_x, (batch, n_inputs), dtype=jnp.float32)

    out = jax.block_until_ready(mlp_forward_fused(fused, x))
    ref = jax.block_until_ready(mlp_forward_ref(params, x))

    assert out.shape == (batch, n_outputs), out.shape
    # bf16 MXU operands with f32 accumulation -> compare against f32 reference
    # at bf16-level tolerance.
    assert jnp.allclose(out, ref, atol=5e-2, rtol=5e-2), "mismatch vs reference"

    print("KERNEL_OK")
</pallas_src>

<mosaic_0001>
module attributes {stable_mosaic.version = 11 : i64} {
  func.func @_mlp_fused_kernel(%arg0: i32, %arg1: memref<8x128xf32, #tpu.memory_space<vmem>>, %arg2: memref<3x128x128xbf16, #tpu.memory_space<vmem>>, %arg3: memref<3x1x128xf32, #tpu.memory_space<vmem>>, %arg4: memref<8x128xf32, #tpu.memory_space<vmem>>) attributes {dimension_semantics = [#tpu.dimension_semantics<parallel>], iteration_bounds = array<i64: 1>, scalar_prefetch = 0 : i64, scratch_operands = 0 : i64, tpu.core_type = #tpu.core_type<tc>, window_params = [{transform_indices = @transform_0, window_bounds = array<i64: 8, 128>}, {pipeline_mode = #tpu.pipeline_mode<synchronous>, transform_indices = @transform_1, window_bounds = array<i64: 3, 128, 128>}, {pipeline_mode = #tpu.pipeline_mode<synchronous>, transform_indices = @transform_2, window_bounds = array<i64: 3, 1, 128>}, {transform_indices = @transform_3, window_bounds = array<i64: 8, 128>}]} {
    %c0 = arith.constant 0 : index
    %c0_0 = arith.constant 0 : index
    %0 = vector.load %arg1[%c0, %c0_0] : memref<8x128xf32, #tpu.memory_space<vmem>>, vector<8x128xf32>
    %1 = arith.truncf %0 : vector<8x128xf32> to vector<8x128xbf16>
    %c0_1 = arith.constant 0 : index
    %c0_2 = arith.constant 0 : index
    %c0_3 = arith.constant 0 : index
    %2 = vector.load %arg2[%c0_1, %c0_2, %c0_3] : memref<3x128x128xbf16, #tpu.memory_space<vmem>>, vector<1x128x128xbf16>
    %3 = vector.shape_cast %2 : vector<1x128x128xbf16> to vector<128x128xbf16>
    %cst = arith.constant dense<0.000000e+00> : vector<8x128xf32>
    %4 = tpu.matmul %1, %3, %cst {dimension_numbers = #tpu.dot_dimension_numbers<[1], [0], [0], [1], [0, 0, 1, 1], [], []>} : vector<8x128xbf16>, vector<128x128xbf16>, vector<8x128xf32> -> vector<8x128xf32>
    %c0_4 = arith.constant 0 : index
    %c0_5 = arith.constant 0 : index
    %c0_6 = arith.constant 0 : index
    %5 = vector.load %arg3[%c0_4, %c0_5, %c0_6] : memref<3x1x128xf32, #tpu.memory_space<vmem>>, vector<1x1x128xf32>
    %6 = vector.shape_cast %5 : vector<1x1x128xf32> to vector<1x128xf32>
    %7 = vector.broadcast %6 : vector<1x128xf32> to vector<8x128xf32>
    %8 = arith.addf %4, %7 : vector<8x128xf32>
    %cst_7 = arith.constant 0.000000e+00 : f32
    %9 = vector.broadcast %cst_7 : f32 to vector<8x128xf32>
    %10 = arith.maximumf %8, %9 : vector<8x128xf32>
    %11 = arith.truncf %10 : vector<8x128xf32> to vector<8x128xbf16>
    %c1 = arith.constant 1 : index
    %c0_8 = arith.constant 0 : index
    %c0_9 = arith.constant 0 : index
    %12 = vector.load %arg2[%c1, %c0_8, %c0_9] : memref<3x128x128xbf16, #tpu.memory_space<vmem>>, vector<1x128x128xbf16>
    %13 = vector.shape_cast %12 : vector<1x128x128xbf16> to vector<128x128xbf16>
    %cst_10 = arith.constant dense<0.000000e+00> : vector<8x128xf32>
    %14 = tpu.matmul %11, %13, %cst_10 {dimension_numbers = #tpu.dot_dimension_numbers<[1], [0], [0], [1], [0, 0, 1, 1], [], []>} : vector<8x128xbf16>, vector<128x128xbf16>, vector<8x128xf32> -> vector<8x128xf32>
    %c1_11 = arith.constant 1 : index
    %c0_12 = arith.constant 0 : index
    %c0_13 = arith.constant 0 : index
    %15 = vector.load %arg3[%c1_11, %c0_12, %c0_13] : memref<3x1x128xf32, #tpu.memory_space<vmem>>, vector<1x1x128xf32>
    %16 = vector.shape_cast %15 : vector<1x1x128xf32> to vector<1x128xf32>
    %17 = vector.broadcast %16 : vector<1x128xf32> to vector<8x128xf32>
    %18 = arith.addf %14, %17 : vector<8x128xf32>
    %cst_14 = arith.constant 0.000000e+00 : f32
    %19 = vector.broadcast %cst_14 : f32 to vector<8x128xf32>
    %20 = arith.maximumf %18, %19 : vector<8x128xf32>
    %21 = arith.truncf %20 : vector<8x128xf32> to vector<8x128xbf16>
    %c2 = arith.constant 2 : index
    %c0_15 = arith.constant 0 : index
    %c0_16 = arith.constant 0 : index
    %22 = vector.load %arg2[%c2, %c0_15, %c0_16] : memref<3x128x128xbf16, #tpu.memory_space<vmem>>, vector<1x128x128xbf16>
    %23 = vector.shape_cast %22 : vector<1x128x128xbf16> to vector<128x128xbf16>
    %cst_17 = arith.constant dense<0.000000e+00> : vector<8x128xf32>
    %24 = tpu.matmul %21, %23, %cst_17 {dimension_numbers = #tpu.dot_dimension_numbers<[1], [0], [0], [1], [0, 0, 1, 1], [], []>} : vector<8x128xbf16>, vector<128x128xbf16>, vector<8x128xf32> -> vector<8x128xf32>
    %c2_18 = arith.constant 2 : index
    %c0_19 = arith.constant 0 : index
    %c0_20 = arith.constant 0 : index
    %25 = vector.load %arg3[%c2_18, %c0_19, %c0_20] : memref<3x1x128xf32, #tpu.memory_space<vmem>>, vector<1x1x128xf32>
    %26 = vector.shape_cast %25 : vector<1x1x128xf32> to vector<1x128xf32>
    %27 = vector.broadcast %26 : vector<1x128xf32> to vector<8x128xf32>
    %28 = arith.addf %24, %27 : vector<8x128xf32>
    %c0_21 = arith.constant 0 : index
    %c0_22 = arith.constant 0 : index
    %29 = vector.load %arg4[%c0_21, %c0_22] : memref<8x128xf32, #tpu.memory_space<vmem>>, vector<8x128xf32>
    tpu.vector_store %arg4[%c0_21, %c0_22], %28 {strides = array<i32>} : memref<8x128xf32, #tpu.memory_space<vmem>>, vector<8x128xf32>,
    return
  }
  func.func @transform_0(%arg0: i32) -> (i32, i32) {
    %c0_i32 = arith.constant 0 : i32
    %c0_i32_0 = arith.constant 0 : i32
    return %arg0, %c0_i32 : i32, i32
  }
  func.func @transform_1(%arg0: i32) -> (i32, i32, i32) {
    %c0_i32 = arith.constant 0 : i32
    %c0_i32_0 = arith.constant 0 : i32
    %c0_i32_1 = arith.constant 0 : i32
    %c0_i32_2 = arith.constant 0 : i32
    return %c0_i32, %c0_i32_0, %c0_i32_1 : i32, i32, i32
  }
  func.func @transform_2(%arg0: i32) -> (i32, i32, i32) {
    %c0_i32 = arith.constant 0 : i32
    %c0_i32_0 = arith.constant 0 : i32
    %c0_i32_1 = arith.constant 0 : i32
    %c0_i32_2 = arith.constant 0 : i32
    return %c0_i32, %c0_i32_0, %c0_i32_1 : i32, i32, i32
  }
  func.func @transform_3(%arg0: i32) -> (i32, i32) {
    %c0_i32 = arith.constant 0 : i32
    %c0_i32_0 = arith.constant 0 : i32
    return %arg0, %c0_i32 : i32, i32
  }
}

</mosaic_0001>

<llo_original>
// kernel: _mlp_forward_impl.1
$region0: #{_mlp_forward_impl.1}
  #allocation0 [shape = 'u32[]', space=smem, size = 0x4, offset = 0x4, fixed_abs, tag = 'smem constant byte address 0x4 - core index']
  #allocation1 [shape = 'u32[144,128]{1,0:T(1,128)}', space=vmem, size = 0x12000, scoped, tag = 'internal scratch']
  %s0 = inlined_call_operand.vmem [shape: f32[8,128], index: 0, kind: input, shape index: {}]
  %s1 = inlined_call_operand.hbm [shape: bf16[3,128,128], index: 1, kind: input, shape index: {}]
  %s2 = inlined_call_operand.vmem [shape: f32[3,1,128], index: 2, kind: input, shape index: {}]
  %s3 = inlined_call_operand.hbm [shape: f32[8,128], index: 3, kind: output, shape index: {}]
  %s4 = sld [smem:[#allocation0]]
  $region26: #{_mlp_forward_impl.1} parent=0
    _
  %s6 = ssub.s32 1, %s4
  %s7 = scalar_select 0, %s6, %s4
  $region1: #{_mlp_forward_impl.1} parent=0
    #allocation2 [shape = 'u8[98304]{0}', space=vmem, size = 0x18000, scoped, tag = 'input window, operand 1, single buffered']
    #allocation3 [shape = 's32[1]{0}', space=sflag, size = 0x4, scoped, tag = 'scoped memory for _mlp_forward_impl.1']
    #allocation4 [shape = 's32[1]{0}', space=sflag, size = 0x4, scoped, tag = 'scoped memory for _mlp_forward_impl.1']
    #allocation5 [shape = 'u8[4096]{0}', space=vmem, size = 0x1000, scoped, tag = 'output window, operand 0, single buffered']
    %8 = vsyncpa [#allocation3], 0
    %9 = vsyncpa [#allocation4], 0
    // Predicated region
    $region2: #{_mlp_forward_impl.1} parent=1 // pred_check
      _
    $region3: #{_mlp_forward_impl.1} parent=1 // pred_check_branch
      %11 = sbr.rel (0) target = $region5
    $region4: #{_mlp_forward_impl.1} parent=1 // pred_region
      _
    $region5: #{_mlp_forward_impl.1} parent=1 // pred_fallthru
      _
    // Predicated region
    $region6: #{_mlp_forward_impl.1} parent=1 // pred_check
      _
    $region7: #{_mlp_forward_impl.1} parent=1 // pred_check_branch
      %13 = sbr.rel (0) target = $region9
    $region8: #{_mlp_forward_impl.1} parent=1 // pred_region
      %s15 = ssub.s32 3072, 3072
      %16 = vsyncadd [#allocation3], %s15
      %s17 = sshll.u32 [#allocation2], 4
      %s18 = int_to_ptr.vmem [resolvable:$true] %s17
      %23 = dma.hbm_to_vmem [thread:$0]  %s1, 3072, %s18, [#allocation3], 64, 64, 4
    $region9: #{_mlp_forward_impl.1} parent=1 // pred_fallthru
      _
    // Predicated region
    $region10: #{_mlp_forward_impl.1} parent=1 // pred_check
      _
    $region11: #{_mlp_forward_impl.1} parent=1 // pred_check_branch
      %25 = sbr.rel (0) target = $region13
    $region12: #{_mlp_forward_impl.1} parent=1 // pred_region
      _
    $region13: #{_mlp_forward_impl.1} parent=1 // pred_fallthru
      _
    // Predicated region
    $region14: #{_mlp_forward_impl.1} parent=1 // pred_check
      _
    $region15: #{_mlp_forward_impl.1} parent=1 // pred_check_branch
      %27 = sbr.rel (0) target = $region17
    $region16: #{_mlp_forward_impl.1} parent=1 // pred_region
      %28 = dma.done [#allocation3], 3072
    $region17: #{_mlp_forward_impl.1} parent=1 // pred_fallthru
      _
    %v30 = vld [vmem:[%s0] sm:$0xff]
    %v31 = vpack.c.bf16 %v30, %v30
    %v32 = vld [vmem:[#allocation2] sm:$0xf]
    %v33 = vld [vmem:[#allocation2 + $0x4] sm:$0xf]
    %v34 = vld [vmem:[#allocation2 + $0x8] sm:$0xf]
    %v35 = vld [vmem:[#allocation2 + $0xc] sm:$0xf]
    %v36 = vld [vmem:[#allocation2 + $0x10] sm:$0xf]
    %v37 = vld [vmem:[#allocation2 + $0x14] sm:$0xf]
    %v38 = vld [vmem:[#allocation2 + $0x18] sm:$0xf]
    %v39 = vld [vmem:[#allocation2 + $0x1c] sm:$0xf]
    %v40 = vld [vmem:[#allocation2 + $0x20] sm:$0xf]
    %v41 = vld [vmem:[#allocation2 + $0x24] sm:$0xf]
    %v42 = vld [vmem:[#allocation2 + $0x28] sm:$0xf]
    %v43 = vld [vmem:[#allocation2 + $0x2c] sm:$0xf]
    %v44 = vld [vmem:[#allocation2 + $0x30] sm:$0xf]
    %v45 = vld [vmem:[#allocation2 + $0x34] sm:$0xf]
    %v46 = vld [vmem:[#allocation2 + $0x38] sm:$0xf]
    %v47 = vld [vmem:[#allocation2 + $0x3c] sm:$0xf]
    %v48 = vld [vmem:[%s2] sm:$0x1]
    %v50 = vlaneseq
    %v51 = vshrl.u32 %v50, 7
    %v52 = vsub.s32 0, %v51
    %v53 = vrot.slane %v48, %v52
    %v71 = vunpack.c.l.b16 %v32
    %v72 = vunpack.c.l.b16 %v33
    %v73 = vunpack.c.l.b16 %v34
    %v74 = vunpack.c.l.b16 %v35
    %v75 = vunpack.c.l.b16 %v36
    %v76 = vunpack.c.l.b16 %v37
    %v77 = vunpack.c.l.b16 %v38
    %v78 = vunpack.c.l.b16 %v39
    %v79 = vunpack.c.l.b16 %v40
    %v80 = vunpack.c.l.b16 %v41
    %v81 = vunpack.c.l.b16 %v42
    %v82 = vunpack.c.l.b16 %v43
    %v83 = vunpack.c.l.b16 %v44
    %v84 = vunpack.c.l.b16 %v45
    %v85 = vunpack.c.l.b16 %v46
    %v86 = vunpack.c.l.b16 %v47
    %v87 = vpack.c.b16 %v72, %v71
    %v88 = vpack.c.b16 %v74, %v73
    %v89 = vpack.c.b16 %v76, %v75
    %v90 = vpack.c.b16 %v78, %v77
    %v91 = vpack.c.b16 %v80, %v79
    %v92 = vpack.c.b16 %v82, %v81
    %v93 = vpack.c.b16 %v84, %v83
    %v94 = vpack.c.b16 %v86, %v85
    %103 = vmatprep.subr.bf16.mxu0 0
    %104 = vmatpush1.bf16.msra.mxu0 %v87
    %105 = vmatprep.subr.bf16.mxu0 0
    %106 = vmatpush1.bf16.msra.mxu0 %v88
    %107 = vmatprep.subr.bf16.mxu0 0
    %108 = vmatpush1.bf16.msra.mxu0 %v89
    %109 = vmatprep.subr.bf16.mxu0 0
    %110 = vmatpush1.bf16.msra.mxu0 %v90
    %111 = vmatprep.subr.bf16.mxu0 0
    %112 = vmatpush1.bf16.msra.mxu0 %v91
    %113 = vmatprep.subr.bf16.mxu0 0
    %114 = vmatpush1.bf16.msra.mxu0 %v92
    %115 = vmatprep.subr.bf16.mxu0 0
    %116 = vmatpush1.bf16.msra.mxu0 %v93
    %117 = vmatprep.subr.bf16.mxu0 0
    %118 = vmatpush1.bf16.msra.mxu0 %v94
    %119 = vmatprep.subr.bf16.mxu0 0
    %120 = vmatpush1.bf16.msra.mxu0 0
    %121 = vmatprep.subr.bf16.mxu0 0
    %122 = vmatpush1.bf16.msra.mxu0 0
    %123 = vmatprep.subr.bf16.mxu0 0
    %124 = vmatpush1.bf16.msra.mxu0 0
    %125 = vmatprep.subr.bf16.mxu0 0
    %126 = vmatpush1.bf16.msra.mxu0 0
    %127 = vmatprep.subr.bf16.mxu0 0
    %128 = vmatpush1.bf16.msra.mxu0 0
    %129 = vmatprep.subr.bf16.mxu0 0
    %130 = vmatpush1.bf16.msra.mxu0 0
    %131 = vmatprep.subr.bf16.mxu0 0
    %132 = vmatpush1.bf16.msra.mxu0 0
    %133 = vmatprep.subr.bf16.mxu0 0
    %134 = vmatpush1.bf16.msra.mxu0 0
    %135 = vmatprep.mubr.bf16.mxu0 0
    %136 = vmatmul.mubr.bf16.gmra.mrb[0].mxu0 %v31
    %v137 = vpop.f32.mrb[0].mxu0
    %v138 = vadd.f32 %v53, %v137
    %v139 = vpop.f32.mrb[0].mxu0
    %v140 = vpop.f32.mrb[0].mxu0
    %v141 = vpop.f32.mrb[0].mxu0
    %142 = vdwg.mxu0
    %v143 = vmax.f32 %v138, 0.0
    %v144 = vpack.c.bf16 %v143, %v143
    %s145 = scalar_lea.vmem [#allocation2], 64
    %v146 = vld [vmem:[%s145] sm:$0xf]
    %v147 = vld [vmem:[%s145 + $0x4] sm:$0xf]
    %v148 = vld [vmem:[%s145 + $0x8] sm:$0xf]
    %v149 = vld [vmem:[%s145 + $0xc] sm:$0xf]
    %v150 = vld [vmem:[%s145 + $0x10] sm:$0xf]
    %v151 = vld [vmem:[%s145 + $0x14] sm:$0xf]
    %v152 = vld [vmem:[%s145 + $0x18] sm:$0xf]
    %v153 = vld [vmem:[%s145 + $0x1c] sm:$0xf]
    %v154 = vld [vmem:[%s145 + $0x20] sm:$0xf]
    %v155 = vld [vmem:[%s145 + $0x24] sm:$0xf]
    %v156 = vld [vmem:[%s145 + $0x28] sm:$0xf]
    %v157 = vld [vmem:[%s145 + $0x2c] sm:$0xf]
    %v158 = vld [vmem:[%s145 + $0x30] sm:$0xf]
    %v159 = vld [vmem:[%s145 + $0x34] sm:$0xf]
    %v160 = vld [vmem:[%s145 + $0x38] sm:$0xf]
    %v161 = vld [vmem:[%s145 + $0x3c] sm:$0xf]
    %s162 = scalar_lea.vmem %s2, 1
    %v163 = vld [vmem:[%s162] sm:$0x1]
    %v165 = vlaneseq
    %v166 = vshrl.u32 %v165, 7
    %v167 = vsub.s32 0, %v166
    %v168 = vrot.slane %v163, %v167
    %v186 = vunpack.c.l.b16 %v146
    %v187 = vunpack.c.l.b16 %v147
    %v188 = vunpack.c.l.b16 %v148
    %v189 = vunpack.c.l.b16 %v149
    %v190 = vunpack.c.l.b16 %v150
    %v191 = vunpack.c.l.b16 %v151
    %v192 = vunpack.c.l.b16 %v152
    %v193 = vunpack.c.l.b16 %v153
    %v194 = vunpack.c.l.b16 %v154
    %v195 = vunpack.c.l.b16 %v155
    %v196 = vunpack.c.l.b16 %v156
    %v197 = vunpack.c.l.b16 %v157
    %v198 = vunpack.c.l.b16 %v158
    %v199 = vunpack.c.l.b16 %v159
    %v200 = vunpack.c.l.b16 %v160
    %v201 = vunpack.c.l.b16 %v161
    %v202 = vpack.c.b16 %v187, %v186
    %v203 = vpack.c.b16 %v189, %v188
    %v204 = vpack.c.b16 %v191, %v190
    %v205 = vpack.c.b16 %v193, %v192
    %v206 = vpack.c.b16 %v195, %v194
    %v207 = vpack.c.b16 %v197, %v196
    %v208 = vpack.c.b16 %v199, %v198
    %v209 = vpack.c.b16 %v201, %v200
    %218 = vmatprep.subr.bf16.mxu0 0
    %219 = vmatpush1.bf16.msra.mxu0 %v202
    %220 = vmatprep.subr.bf16.mxu0 0
    %221 = vmatpush1.bf16.msra.mxu0 %v203
    %222 = vmatprep.subr.bf16.mxu0 0
    %223 = vmatpush1.bf16.msra.mxu0 %v204
    %224 = vmatprep.subr.bf16.mxu0 0
    %225 = vmatpush1.bf16.msra.mxu0 %v205
    %226 = vmatprep.subr.bf16.mxu0 0
    %227 = vmatpush1.bf16.msra.mxu0 %v206
    %228 = vmatprep.subr.bf16.mxu0 0
    %229 = vmatpush1.bf16.msra.mxu0 %v207
    %230 = vmatprep.subr.bf16.mxu0 0
    %231 = vmatpush1.bf16.msra.mxu0 %v208
    %232 = vmatprep.subr.bf16.mxu0 0
    %233 = vmatpush1.bf16.msra.mxu0 %v209
    %234 = vmatprep.subr.bf16.mxu0 0
    %235 = vmatpush1.bf16.msra.mxu0 0
    %236 = vmatprep.subr.bf16.mxu0 0
    %237 = vmatpush1.bf16.msra.mxu0 0
    %238 = vmatprep.subr.bf16.mxu0 0
    %239 = vmatpush1.bf16.msra.mxu0 0
    %240 = vmatprep.subr.bf16.mxu0 0
    %241 = vmatpush1.bf16.msra.mxu0 0
    %242 = vmatprep.subr.bf16.mxu0 0
    %243 = vmatpush1.bf16.msra.mxu0 0
    %244 = vmatprep.subr.bf16.mxu0 0
    %245 = vmatpush1.bf16.msra.mxu0 0
    %246 = vmatprep.subr.bf16.mxu0 0
    %247 = vmatpush1.bf16.msra.mxu0 0
    %248 = vmatprep.subr.bf16.mxu0 0
    %249 = vmatpush1.bf16.msra.mxu0 0
    %250 = vmatprep.mubr.bf16.mxu0 0
    %251 = vmatmul.mubr.bf16.gmra.mrb[0].mxu0 %v144
    %v252 = vpop.f32.mrb[0].mxu0
    %v253 = vadd.f32 %v168, %v252
    %v254 = vpop.f32.mrb[0].mxu0
    %v255 = vpop.f32.mrb[0].mxu0
    %v256 = vpop.f32.mrb[0].mxu0
    %257 = vdwg.mxu0
    %v258 = vmax.f32 %v253, 0.0
    %v259 = vpack.c.bf16 %v258, %v258
    %s260 = scalar_lea.vmem [#allocation2], 128
    %v261 = vld [vmem:[%s260] sm:$0xf]
    %v262 = vld [vmem:[%s260 + $0x4] sm:$0xf]
    %v263 = vld [vmem:[%s260 + $0x8] sm:$0xf]
    %v264 = vld [vmem:[%s260 + $0xc] sm:$0xf]
    %v265 = vld [vmem:[%s260 + $0x10] sm:$0xf]
    %v266 = vld [vmem:[%s260 + $0x14] sm:$0xf]
    %v267 = vld [vmem:[%s260 + $0x18] sm:$0xf]
    %v268 = vld [vmem:[%s260 + $0x1c] sm:$0xf]
    %v269 = vld [vmem:[%s260 + $0x20] sm:$0xf]
    %v270 = vld [vmem:[%s260 + $0x24] sm:$0xf]
    %v271 = vld [vmem:[%s260 + $0x28] sm:$0xf]
    %v272 = vld [vmem:[%s260 + $0x2c] sm:$0xf]
    %v273 = vld [vmem:[%s260 + $0x30] sm:$0xf]
    %v274 = vld [vmem:[%s260 + $0x34] sm:$0xf]
    %v275 = vld [vmem:[%s260 + $0x38] sm:$0xf]
    %v276 = vld [vmem:[%s260 + $0x3c] sm:$0xf]
    %s277 = scalar_lea.vmem %s2, 2
    %v278 = vld [vmem:[%s277] sm:$0x1]
    %v280 = vlaneseq
    %v281 = vshrl.u32 %v280, 7
    %v282 = vsub.s32 0, %v281
    %v283 = vrot.slane %v278, %v282
    %v301 = vunpack.c.l.b16 %v261
    %v302 = vunpack.c.l.b16 %v262
    %v303 = vunpack.c.l.b16 %v263
    %v304 = vunpack.c.l.b16 %v264
    %v305 = vunpack.c.l.b16 %v265
    %v306 = vunpack.c.l.b16 %v266
    %v307 = vunpack.c.l.b16 %v267
    %v308 = vunpack.c.l.b16 %v268
    %v309 = vunpack.c.l.b16 %v269
    %v310 = vunpack.c.l.b16 %v270
    %v311 = vunpack.c.l.b16 %v271
    %v312 = vunpack.c.l.b16 %v272
    %v313 = vunpack.c.l.b16 %v273
    %v314 = vunpack.c.l.b16 %v274
    %v315 = vunpack.c.l.b16 %v275
    %v316 = vunpack.c.l.b16 %v276
    %v317 = vpack.c.b16 %v302, %v301
    %v318 = vpack.c.b16 %v304, %v303
    %v319 = vpack.c.b16 %v306, %v305
    %v320 = vpack.c.b16 %v308, %v307
    %v321 = vpack.c.b16 %v310, %v309
    %v322 = vpack.c.b16 %v312, %v311
    %v323 = vpack.c.b16 %v314, %v313
    %v324 = vpack.c.b16 %v316, %v315
    %333 = vmatprep.subr.bf16.mxu0 0
    %334 = vmatpush1.bf16.msra.mxu0 %v317
    %335 = vmatprep.subr.bf16.mxu0 0
    %336 = vmatpush1.bf16.msra.mxu0 %v318
    %337 = vmatprep.subr.bf16.mxu0 0
    %338 = vmatpush1.bf16.msra.mxu0 %v319
    %339 = vmatprep.subr.bf16.mxu0 0
    %340 = vmatpush1.bf16.msra.mxu0 %v320
    %341 = vmatprep.subr.bf16.mxu0 0
    %342 = vmatpush1.bf16.msra.mxu0 %v321
    %343 = vmatprep.subr.bf16.mxu0 0
    %344 = vmatpush1.bf16.msra.mxu0 %v322
    %345 = vmatprep.subr.bf16.mxu0 0
    %346 = vmatpush1.bf16.msra.mxu0 %v323
    %347 = vmatprep.subr.bf16.mxu0 0
    %348 = vmatpush1.bf16.msra.mxu0 %v324
    %349 = vmatprep.subr.bf16.mxu0 0
    %350 = vmatpush1.bf16.msra.mxu0 0
    %351 = vmatprep.subr.bf16.mxu0 0
    %352 = vmatpush1.bf16.msra.mxu0 0
    %353 = vmatprep.subr.bf16.mxu0 0
    %354 = vmatpush1.bf16.msra.mxu0 0
    %355 = vmatprep.subr.bf16.mxu0 0
    %356 = vmatpush1.bf16.msra.mxu0 0
    %357 = vmatprep.subr.bf16.mxu0 0
    %358 = vmatpush1.bf16.msra.mxu0 0
    %359 = vmatprep.subr.bf16.mxu0 0
    %360 = vmatpush1.bf16.msra.mxu0 0
    %361 = vmatprep.subr.bf16.mxu0 0
    %362 = vmatpush1.bf16.msra.mxu0 0
    %363 = vmatprep.subr.bf16.mxu0 0
    %364 = vmatpush1.bf16.msra.mxu0 0
    %365 = vmatprep.mubr.bf16.mxu0 0
    %366 = vmatmul.mubr.bf16.gmra.mrb[0].mxu0 %v259
    %v367 = vpop.f32.mrb[0].mxu0
    %v368 = vadd.f32 %v283, %v367
    %v369 = vpop.f32.mrb[0].mxu0
    %v370 = vpop.f32.mrb[0].mxu0
    %v371 = vpop.f32.mrb[0].mxu0
    %372 = vdwg.mxu0
    %373 = vst [vmem:[#allocation5] sm:$0xff] %v368
    // Predicated region
    $region18: #{_mlp_forward_impl.1} parent=1 // pred_check
      _
    $region19: #{_mlp_forward_impl.1} parent=1 // pred_check_branch
      %375 = sbr.rel (0) target = $region21
    $region20: #{_mlp_forward_impl.1} parent=1 // pred_region
      %s377 = ssub.s32 128, 128
      %378 = vsyncadd [#allocation4], %s377
      %s380 = sshll.u32 [#allocation5], 4
      %s381 = int_to_ptr.vmem [resolvable:$true] %s380
      %383 = dma.vmem_to_hbm [thread:$0]  %s381, 128, %s3, [#allocation4]
    $region21: #{_mlp_forward_impl.1} parent=1 // pred_fallthru
      _
    // Predicated region
    $region22: #{_mlp_forward_impl.1} parent=1 // pred_check
      _
    $region23: #{_mlp_forward_impl.1} parent=1 // pred_check_branch
      %385 = sbr.rel (0) target = $region25
    $region24: #{_mlp_forward_impl.1} parent=1 // pred_region
      %386 = dma.done [#allocation4], 128
    $region25: #{_mlp_forward_impl.1} parent=1 // pred_fallthru
      _
    %387 = vsyncpa [#allocation3], 1
    %388 = vsyncpa [#allocation4], 1

</llo_original>
